<compile_context>
chip_gen: v5e
topology: v5e:2x2
jax: 0.10.0
libtpu: 0.0.40
codegen_flags: <defaults>
</compile_context>

<pallas_src>
import functools

import jax
import jax.numpy as jnp
from jax.experimental import pallas as pl
from jax.experimental.pallas import tpu as pltpu


_FUSED_MAX_ROW_BYTES = 6 << 20    # max per-batch-row x slab for the fused path
_FUSED_BLOCK_TARGET = 2 << 20     # target bytes per (Bt, C, L) block
_TWO_PASS_TILE_TARGET = 1 << 20   # target bytes per (1, C, lt) block


def _round_up(n, m):
    return ((n + m - 1) // m) * m


def _choose_batch_tile(B, row_bytes, target_bytes=_FUSED_BLOCK_TARGET):
    """Largest divisor of B keeping the block <= target and >= 2 grid steps."""
    best = 1
    for d in range(1, B + 1):
        if B % d:
            continue
        if d * row_bytes > target_bytes:
            continue
        if B // d >= 2:           # keep both v7x TensorCores busy when B >= 2
            best = d
    return best


def _choose_l_tile(L, bytes_per_l, target_bytes=_TWO_PASS_TILE_TARGET):
    """Lane-dense (multiple-of-128) L tile of roughly `target_bytes`."""
    lt = max(128, (target_bytes // max(bytes_per_l, 1) // 128) * 128)
    return int(min(lt, _round_up(L, 128)))


# ---------------------------------------------------------------------------
# Fused path: pooling + MLP + scale*x over a VMEM-resident (Bt, C, L) slab
# ---------------------------------------------------------------------------
def _fused_kernel(x_ref, w1_ref, b1_ref, w2_ref, b2_ref, o_ref, *, inv_len):
    xb = x_ref[...].astype(jnp.float32)                     # (Bt, C, L)
    bt = xb.shape[0]
    avg = jnp.sum(xb, axis=-1) * inv_len                    # (Bt, C)
    mx = jnp.max(xb, axis=-1)                               # (Bt, C)
    # Batched MLP: one (2*Bt, C) matmul pair serves both pooled vectors of
    # every batch row in the block (rows stay independent through the matmul).
    v = jnp.concatenate([avg, mx], axis=0)                  # (2*Bt, C)
    h = jnp.maximum(
        jnp.dot(v, w1_ref[...], preferred_element_type=jnp.float32)
        + b1_ref[...], 0.0)                                 # (2*Bt, H)
    o = jax.nn.sigmoid(
        jnp.dot(h, w2_ref[...], preferred_element_type=jnp.float32)
        + b2_ref[...])                                      # (2*Bt, C)
    # Outer sigmoid on mlp(avg) + mlp(max), as in the PyTorch forward.
    scale = jax.nn.sigmoid(o[:bt, :] + o[bt:, :])           # (Bt, C)
    o_ref[...] = (scale[:, :, None] * xb).astype(o_ref.dtype)


# ---------------------------------------------------------------------------
# Fallback pass 1: masked pooling over L tiles + MLP epilogue -> scale[B,C,1]
# ---------------------------------------------------------------------------
def _pool_mlp_kernel(x_ref, w1_ref, b1_ref, w2_ref, b2_ref, scale_ref,
                     sum_acc, max_acc, *, seq_len, l_tile):
    k = pl.program_id(1)

    @pl.when(k == 0)
    def _():
        sum_acc[...] = jnp.zeros_like(sum_acc)
        max_acc[...] = jnp.full_like(max_acc, -jnp.inf)

    xb = x_ref[...].astype(jnp.float32)                     # (1, C, lt)
    pos = jax.lax.broadcasted_iota(jnp.int32, xb.shape, 2) + k * l_tile
    valid = pos < seq_len
    # Tile-layout accumulators: elementwise accumulate here, single XLU
    # cross-lane reduce only in the k==last epilogue.
    sum_acc[...] += jnp.where(valid, xb, 0.0)
    max_acc[...] = jnp.maximum(max_acc[...], jnp.where(valid, xb, -jnp.inf))

    @pl.when(k == pl.num_programs(1) - 1)
    def _():
        avg = jnp.sum(sum_acc[...], axis=-1) * (1.0 / seq_len)   # (1, C)
        mx = jnp.max(max_acc[...], axis=-1)                      # (1, C)
        v = jnp.concatenate([avg, mx], axis=0)                   # (2, C)
        h = jnp.maximum(
            jnp.dot(v, w1_ref[...], preferred_element_type=jnp.float32)
            + b1_ref[...], 0.0)
        o = jax.nn.sigmoid(
            jnp.dot(h, w2_ref[...], preferred_element_type=jnp.float32)
            + b2_ref[...])                                       # (2, C)
        scale = jax.nn.sigmoid(o[0:1, :] + o[1:2, :])            # (1, C)
        scale_ref[...] = scale[:, :, None]                       # (1, C, 1)


# ---------------------------------------------------------------------------
# Fallback pass 2: streaming, lane-dense, megacore-parallel  out = scale * x
# ---------------------------------------------------------------------------
def _apply_scale_kernel(scale_ref, x_ref, o_ref):
    s = scale_ref[...]                                      # (1, C, 1)  f32
    xb = x_ref[...].astype(jnp.float32)                     # (1, C, lt)
    o_ref[...] = (s * xb).astype(o_ref.dtype)


def channel_attention(x, w1_t, b1, w2_t, b2, *, force_two_pass=False,
                      l_tile=None):
    """x: [B, C, L]; w1_t: [C, H]; b1: [1, H]; w2_t: [H, C]; b2: [1, C]."""
    B, C, L = x.shape
    H = w1_t.shape[1]
    itemsize = jnp.dtype(x.dtype).itemsize
    row_bytes = C * L * itemsize

    if not force_two_pass and row_bytes <= _FUSED_MAX_ROW_BYTES:
        # ----------------- fused single-pass path -------------------------
        bt = _choose_batch_tile(B, row_bytes)
        nb = B // bt
        block_bytes = bt * row_bytes
        # 2x double-buffered input blocks + 2x output blocks + weights/margin,
        # clamped to <= 48 MiB for v7x's 64 MiB VMEM (and raised above v5e's
        # 16 MiB scoped default).
        vmem_limit = int(min(max(4 * block_bytes + (2 << 20), 32 << 20),
                             48 << 20))
        # TODO(synk): for bf16 x, pick bt so bt*C % 16 == 0 to avoid sublane padding.
        kernel = functools.partial(_fused_kernel, inv_len=1.0 / L)
        return pl.pallas_call(
            kernel,
            out_shape=jax.ShapeDtypeStruct((B, C, L), x.dtype),
            grid=(nb,),
            in_specs=[
                pl.BlockSpec((bt, C, L), lambda b: (b, 0, 0)),
                pl.BlockSpec((C, H), lambda b: (0, 0)),
                pl.BlockSpec((1, H), lambda b: (0, 0)),
                pl.BlockSpec((H, C), lambda b: (0, 0)),
                pl.BlockSpec((1, C), lambda b: (0, 0)),
            ],
            out_specs=pl.BlockSpec((bt, C, L), lambda b: (b, 0, 0)),
            compiler_params=pltpu.CompilerParams(
                dimension_semantics=("parallel",),
                vmem_limit_bytes=vmem_limit),
            cost_estimate=pl.CostEstimate(
                flops=3 * B * C * L + 8 * B * C * H,
                transcendentals=3 * B * C,
                bytes_accessed=2 * B * C * L * itemsize
                               + 2 * C * H * 4 + (C + H) * 4),
        )(x, w1_t, b1, w2_t, b2)

    # --------------- two-pass fallback for very large C*L -----------------
    lt = l_tile if l_tile is not None else _choose_l_tile(L, C * itemsize)
    nl = pl.cdiv(L, lt)
    blk_bytes = C * lt * itemsize

    pool_kernel = functools.partial(_pool_mlp_kernel, seq_len=L, l_tile=lt)
    pool_vmem = int(min(max(2 * blk_bytes + 2 * C * lt * 4 + (2 << 20),
                            32 << 20), 48 << 20))
    scale = pl.pallas_call(
        pool_kernel,
        out_shape=jax.ShapeDtypeStruct((B, C, 1), jnp.float32),
        grid=(B, nl),
        in_specs=[
            pl.BlockSpec((1, C, lt), lambda b, k: (b, 0, k)),
            pl.BlockSpec((C, H), lambda b, k: (0, 0)),
            pl.BlockSpec((1, H), lambda b, k: (0, 0)),
            pl.BlockSpec((H, C), lambda b, k: (0, 0)),
            pl.BlockSpec((1, C), lambda b, k: (0, 0)),
        ],
        out_specs=pl.BlockSpec((1, C, 1), lambda b, k: (b, 0, 0)),
        scratch_shapes=[pltpu.VMEM((1, C, lt), jnp.float32),   # running sum
                        pltpu.VMEM((1, C, lt), jnp.float32)],  # running max
        compiler_params=pltpu.CompilerParams(
            dimension_semantics=("parallel", "arbitrary"),
            vmem_limit_bytes=pool_vmem),
        cost_estimate=pl.CostEstimate(
            flops=2 * B * C * L + 8 * B * C * H,
            transcendentals=3 * B * C,
            bytes_accessed=B * C * L * itemsize + B * C * 4),
    )(x, w1_t, b1, w2_t, b2)

    apply_vmem = int(min(max(4 * blk_bytes + (2 << 20), 32 << 20), 48 << 20))
    out = pl.pallas_call(
        _apply_scale_kernel,
        out_shape=jax.ShapeDtypeStruct((B, C, L), x.dtype),
        grid=(B, nl),
        in_specs=[
            pl.BlockSpec((1, C, 1), lambda b, k: (b, 0, 0)),
            pl.BlockSpec((1, C, lt), lambda b, k: (b, 0, k)),
        ],
        out_specs=pl.BlockSpec((1, C, lt), lambda b, k: (b, 0, k)),
        compiler_params=pltpu.CompilerParams(
            dimension_semantics=("parallel", "parallel"),
            vmem_limit_bytes=apply_vmem),
        cost_estimate=pl.CostEstimate(
            flops=B * C * L,
            transcendentals=0,
            bytes_accessed=2 * B * C * L * itemsize + B * C * 4),
    )(scale, x)
    return out


# ---------------------------------------------------------------------------
# Pure-JAX reference (mirrors the PyTorch forward, incl. the double sigmoid)
# ---------------------------------------------------------------------------
def channel_attention_ref(x, w1_t, b1, w2_t, b2):
    xf = x.astype(jnp.float32)
    avg = jnp.mean(xf, axis=-1)
    mx = jnp.max(xf, axis=-1)

    def mlp(v):
        h = jax.nn.relu(v @ w1_t + b1)
        return jax.nn.sigmoid(h @ w2_t + b2)

    scale = jax.nn.sigmoid(mlp(avg) + mlp(mx))
    return (scale[:, :, None] * xf).astype(x.dtype)


if __name__ == "__main__":
    # config: in_channel=8, r=2 -> hidden = 4.
    B, C, L, r = 2, 8, 1024, 2
    H = C // r

    key = jax.random.PRNGKey(0)
    kx, k1, k2, k3, k4 = jax.random.split(key, 5)

    x = jax.random.normal(kx, (B, C, L), dtype=jnp.float32)

    # PyTorch Linear weights are [out, in]; pre-transpose to [in, out].
    w1 = jax.random.normal(k1, (H, C), dtype=jnp.float32) * 0.1   # Linear(C -> H)
    b1 = jax.random.normal(k2, (H,), dtype=jnp.float32) * 0.1
    w2 = jax.random.normal(k3, (C, H), dtype=jnp.float32) * 0.1   # Linear(H -> C)
    b2 = jax.random.normal(k4, (C,), dtype=jnp.float32) * 0.1

    w1_t = w1.T                      # [C, H]
    w2_t = w2.T                      # [H, C]
    b1_r = b1.reshape(1, H)
    b2_r = b2.reshape(1, C)

    # Fused (default) path.
    out = jax.block_until_ready(channel_attention(x, w1_t, b1_r, w2_t, b2_r))
    ref = channel_attention_ref(x, w1_t, b1_r, w2_t, b2_r)
    assert out.shape == (B, C, L)
    assert jnp.allclose(out, ref, atol=1e-5, rtol=1e-5), "fused path mismatch"

    # Two-pass fallback (large C*L route), exercised here with a
    # non-128-divisible L and a small forced tile so the masked tail and the
    # multi-tile accumulator loop are both covered.
    L2 = 1000
    x2 = jax.random.normal(jax.random.PRNGKey(1), (B, C, L2), dtype=jnp.float32)
    out2 = jax.block_until_ready(
        channel_attention(x2, w1_t, b1_r, w2_t, b2_r,
                          force_two_pass=True, l_tile=256))
    ref2 = channel_attention_ref(x2, w1_t, b1_r, w2_t, b2_r)
    assert out2.shape == (B, C, L2)
    assert jnp.allclose(out2, ref2, atol=1e-5, rtol=1e-5), "two-pass mismatch"

    print("KERNEL_OK")
</pallas_src>

<mosaic_0001>
module attributes {stable_mosaic.version = 11 : i64} {
  func.func @_fused_kernel(%arg0: i32, %arg1: memref<1x8x1024xf32, #tpu.memory_space<vmem>>, %arg2: memref<8x4xf32, #tpu.memory_space<vmem>>, %arg3: memref<1x4xf32, #tpu.memory_space<vmem>>, %arg4: memref<4x8xf32, #tpu.memory_space<vmem>>, %arg5: memref<1x8xf32, #tpu.memory_space<vmem>>, %arg6: memref<1x8x1024xf32, #tpu.memory_space<vmem>>) attributes {dimension_semantics = [#tpu.dimension_semantics<parallel>], iteration_bounds = array<i64: 2>, scalar_prefetch = 0 : i64, scratch_operands = 0 : i64, tpu.core_type = #tpu.core_type<tc>, window_params = [{transform_indices = @transform_0, window_bounds = array<i64: 1, 8, 1024>}, {pipeline_mode = #tpu.pipeline_mode<synchronous>, transform_indices = @transform_1, window_bounds = array<i64: 8, 4>}, {pipeline_mode = #tpu.pipeline_mode<synchronous>, transform_indices = @transform_2, window_bounds = array<i64: 1, 4>}, {pipeline_mode = #tpu.pipeline_mode<synchronous>, transform_indices = @transform_3, window_bounds = array<i64: 4, 8>}, {pipeline_mode = #tpu.pipeline_mode<synchronous>, transform_indices = @transform_4, window_bounds = array<i64: 1, 8>}, {transform_indices = @transform_5, window_bounds = array<i64: 1, 8, 1024>}]} {
    %c0 = arith.constant 0 : index
    %c0_0 = arith.constant 0 : index
    %c0_1 = arith.constant 0 : index
    %0 = vector.load %arg1[%c0, %c0_0, %c0_1] : memref<1x8x1024xf32, #tpu.memory_space<vmem>>, vector<1x8x1024xf32>
    %cst = arith.constant dense<0.000000e+00> : vector<1x8xf32>
    %1 = vector.multi_reduction <add>, %0, %cst [2] : vector<1x8x1024xf32> to vector<1x8xf32>
    %cst_2 = arith.constant 9.765625E-4 : f32
    %2 = vector.broadcast %cst_2 : f32 to vector<1x8xf32>
    %3 = arith.mulf %1, %2 : vector<1x8xf32>
    %cst_3 = arith.constant dense<0xFF800000> : vector<1x8xf32>
    %4 = vector.multi_reduction <maximumf>, %0, %cst_3 [2] : vector<1x8x1024xf32> to vector<1x8xf32>
    %5 = tpu.concatenate %3, %4 in 0 : vector<1x8xf32>, vector<1x8xf32> -> vector<2x8xf32>
    %c0_4 = arith.constant 0 : index
    %c0_5 = arith.constant 0 : index
    %6 = vector.load %arg2[%c0_4, %c0_5] : memref<8x4xf32, #tpu.memory_space<vmem>>, vector<8x4xf32>
    %cst_6 = arith.constant dense<0.000000e+00> : vector<2x4xf32>
    %7 = tpu.matmul %5, %6, %cst_6 {dimension_numbers = #tpu.dot_dimension_numbers<[1], [0], [0], [1], [0, 0, 1, 1], [], []>} : vector<2x8xf32>, vector<8x4xf32>, vector<2x4xf32> -> vector<2x4xf32>
    %c0_7 = arith.constant 0 : index
    %c0_8 = arith.constant 0 : index
    %8 = vector.load %arg3[%c0_7, %c0_8] : memref<1x4xf32, #tpu.memory_space<vmem>>, vector<1x4xf32>
    %9 = vector.broadcast %8 : vector<1x4xf32> to vector<2x4xf32>
    %10 = arith.addf %7, %9 : vector<2x4xf32>
    %cst_9 = arith.constant 0.000000e+00 : f32
    %11 = vector.broadcast %cst_9 : f32 to vector<2x4xf32>
    %12 = arith.maximumf %10, %11 : vector<2x4xf32>
    %c0_10 = arith.constant 0 : index
    %c0_11 = arith.constant 0 : index
    %13 = vector.load %arg4[%c0_10, %c0_11] : memref<4x8xf32, #tpu.memory_space<vmem>>, vector<4x8xf32>
    %cst_12 = arith.constant dense<0.000000e+00> : vector<2x8xf32>
    %14 = tpu.matmul %12, %13, %cst_12 {dimension_numbers = #tpu.dot_dimension_numbers<[1], [0], [0], [1], [0, 0, 1, 1], [], []>} : vector<2x4xf32>, vector<4x8xf32>, vector<2x8xf32> -> vector<2x8xf32>
    %c0_13 = arith.constant 0 : index
    %c0_14 = arith.constant 0 : index
    %15 = vector.load %arg5[%c0_13, %c0_14] : memref<1x8xf32, #tpu.memory_space<vmem>>, vector<1x8xf32>
    %16 = vector.broadcast %15 : vector<1x8xf32> to vector<2x8xf32>
    %17 = arith.addf %14, %16 : vector<2x8xf32>
    %18 = arith.negf %17 : vector<2x8xf32>
    %19 = math.exp %18 : vector<2x8xf32>
    %cst_15 = arith.constant 1.000000e+00 : f32
    %20 = vector.broadcast %cst_15 : f32 to vector<2x8xf32>
    %21 = arith.addf %20, %19 : vector<2x8xf32>
    %22 = arith.divf %20, %21 : vector<2x8xf32>
    %23 = vector.extract_strided_slice %22 {offsets = [0, 0], sizes = [1, 8], strides = [1, 1]} : vector<2x8xf32> to vector<1x8xf32>
    %24 = vector.extract_strided_slice %22 {offsets = [1, 0], sizes = [1, 8], strides = [1, 1]} : vector<2x8xf32> to vector<1x8xf32>
    %25 = arith.addf %23, %24 : vector<1x8xf32>
    %26 = arith.negf %25 : vector<1x8xf32>
    %27 = math.exp %26 : vector<1x8xf32>
    %cst_16 = arith.constant 1.000000e+00 : f32
    %28 = vector.broadcast %cst_16 : f32 to vector<1x8xf32>
    %29 = arith.addf %28, %27 : vector<1x8xf32>
    %30 = arith.divf %28, %29 : vector<1x8xf32>
    %31 = vector.shape_cast %30 : vector<1x8xf32> to vector<1x8x1xf32>
    %32 = vector.broadcast %31 : vector<1x8x1xf32> to vector<1x8x1024xf32>
    %33 = arith.mulf %32, %0 : vector<1x8x1024xf32>
    %c0_17 = arith.constant 0 : index
    %c0_18 = arith.constant 0 : index
    %c0_19 = arith.constant 0 : index
    %34 = vector.load %arg6[%c0_17, %c0_18, %c0_19] : memref<1x8x1024xf32, #tpu.memory_space<vmem>>, vector<1x8x1024xf32>
    tpu.vector_store %arg6[%c0_17, %c0_18, %c0_19], %33 {strides = array<i32>} : memref<1x8x1024xf32, #tpu.memory_space<vmem>>, vector<1x8x1024xf32>,
    return
  }
  func.func @transform_0(%arg0: i32) -> (i32, i32, i32) {
    %c0_i32 = arith.constant 0 : i32
    %c0_i32_0 = arith.constant 0 : i32
    %c0_i32_1 = arith.constant 0 : i32
    return %arg0, %c0_i32, %c0_i32_0 : i32, i32, i32
  }
  func.func @transform_1(%arg0: i32) -> (i32, i32) {
    %c0_i32 = arith.constant 0 : i32
    %c0_i32_0 = arith.constant 0 : i32
    %c0_i32_1 = arith.constant 0 : i32
    return %c0_i32, %c0_i32_0 : i32, i32
  }
  func.func @transform_2(%arg0: i32) -> (i32, i32) {
    %c0_i32 = arith.constant 0 : i32
    %c0_i32_0 = arith.constant 0 : i32
    %c0_i32_1 = arith.constant 0 : i32
    return %c0_i32, %c0_i32_0 : i32, i32
  }
  func.func @transform_3(%arg0: i32) -> (i32, i32) {
    %c0_i32 = arith.constant 0 : i32
    %c0_i32_0 = arith.constant 0 : i32
    %c0_i32_1 = arith.constant 0 : i32
    return %c0_i32, %c0_i32_0 : i32, i32
  }
  func.func @transform_4(%arg0: i32) -> (i32, i32) {
    %c0_i32 = arith.constant 0 : i32
    %c0_i32_0 = arith.constant 0 : i32
    %c0_i32_1 = arith.constant 0 : i32
    return %c0_i32, %c0_i32_0 : i32, i32
  }
  func.func @transform_5(%arg0: i32) -> (i32, i32, i32) {
    %c0_i32 = arith.constant 0 : i32
    %c0_i32_0 = arith.constant 0 : i32
    %c0_i32_1 = arith.constant 0 : i32
    return %arg0, %c0_i32, %c0_i32_0 : i32, i32, i32
  }
}

</mosaic_0001>

<llo_original>
// kernel: tpu_custom_call.1
$region0: #{tpu_custom_call.1}
  #allocation0 [shape = 'u32[]', space=smem, size = 0x4, offset = 0x4, fixed_abs, tag = 'smem constant byte address 0x4 - core index']
  #allocation1 [shape = 'u32[72,128]{1,0:T(1,128)}', space=vmem, size = 0x9000, scoped, tag = 'internal scratch']
  %s0 = inlined_call_operand.hbm [shape: f32[2,8,1024], index: 0, kind: input, shape index: {}]
  %s1 = inlined_call_operand.vmem [shape: f32[8,4], index: 1, kind: input, shape index: {}]
  %s2 = inlined_call_operand.vmem [shape: f32[1,4], index: 2, kind: input, shape index: {}]
  %s3 = inlined_call_operand.vmem [shape: f32[4,8], index: 3, kind: input, shape index: {}]
  %s4 = inlined_call_operand.vmem [shape: f32[1,8], index: 4, kind: input, shape index: {}]
  %s5 = inlined_call_operand.hbm [shape: f32[2,8,1024], index: 5, kind: output, shape index: {}]
  %s6 = sld [smem:[#allocation0]]
  $region57: #{tpu_custom_call.1} parent=0
    _
  %s8 = ssub.s32 1, %s6
  %s9 = scalar_select 0, %s8, %s6
  $region1: #{tpu_custom_call.1} parent=0
    #allocation2 [shape = 'u8[65536]{0}', space=vmem, size = 0x10000, scoped, tag = 'input window, operand 0']
    #allocation3 [shape = 's32[2]{0}', space=sflag, size = 0x8, scoped, tag = 'scoped memory for tpu_custom_call.1']
    #allocation4 [shape = 's32[2]{0}', space=sflag, size = 0x8, scoped, tag = 'scoped memory for tpu_custom_call.1']
    #allocation5 [shape = 'u8[65536]{0}', space=vmem, size = 0x10000, scoped, tag = 'output window, operand 0']
    %10 = vsyncpa [#allocation3], 0
    %s11 = scalar_lea.sflag [#allocation3], 1
    %12 = vsyncpa %s11, 0
    %13 = vsyncpa [#allocation4], 0
    %s14 = scalar_lea.sflag [#allocation4], 1
    %15 = vsyncpa %s14, 0
    loop: start=0, step=1, limit=4
    $region2: #{tpu_custom_call.1} parent=1 // loop_pre_header
      _
    $region3: #{tpu_custom_call.1} parent=1 // loop_header
      %s17 = sphi 0, %s21
      %p18 = scmp.ge.s32.totalorder %s17, 4
      %s27 = sphi 0, %s29
      %s30 = sphi 0, %s27
      %s31 = sphi 0, %s30
      %s47 = sphi 0, %s31
      %s51 = sphi 0, %s51
      %s53 = sphi 0, %s51
      %s54 = sphi 0, %s53
      %s68 = sphi 0, %s54
      %s72 = sphi 0, %s72
      %s74 = sphi 0, %s72
      %s75 = sphi 0, %s74
      %s89 = sphi 0, %s75
      %s93 = sphi 0, %s93
      %s95 = sphi 0, %s93
      %s96 = sphi 0, %s95
      %s110 = sphi 0, %s96
      %s114 = sphi 0, %s114
      %s116 = sphi 0, %s114
      %s117 = sphi 0, %s116
      %s131 = sphi 0, %s117
      %s137 = sphi 0, %s139
      %s140 = sphi 0, %s137
      %s141 = sphi 0, %s140
      %s157 = sphi 0, %s141
    $region4: #{tpu_custom_call.1} parent=1 // loop_header_branch
      %20 = sbr.rel (%p18) target = $region8
    $region5: #{tpu_custom_call.1} parent=1 // loop_body
      %s22 = ssub.s32 %s17, 1
      %s23 = ssub.s32 %s17, 2
      %s24 = sadd.s32 %s17, 1
      %s25 = ssub.s32 %s17, %s24
      %p26 = scmp.eq.s32.totalorder %s25, 0
      %s28 = sadd.s32 %s27, 1
      %s29 = scalar_select %p26, %s27, %s28
      %p32 = pneg %p26
      %p33 = scmp.eq.s32.totalorder %s17, 1
      %p34 = por %p32, %p33
      %p35 = scmp.ne.s32.totalorder %s27, %s30
      %p36 = scmp.eq.s32.totalorder %s17, 0
      %p37 = por %p35, %p36
      %p38 = scmp.ne.s32.totalorder %s27, %s30
      %p39 = scmp.eq.s32.totalorder %s22, 1
      %p40 = por %p38, %p39
      %p41 = scmp.ne.s32.totalorder %s30, %s31
      %p42 = scmp.eq.s32.totalorder %s22, 0
      %p43 = por %p41, %p42
      %p44 = scmp.ne.s32.totalorder %s30, %s31
      %p45 = scmp.eq.s32.totalorder %s23, 1
      %p46 = por %p44, %p45
      %p48 = scmp.ne.s32.totalorder %s31, %s47
      %p49 = scmp.eq.s32.totalorder %s23, 0
      %p50 = por %p48, %p49
      %s52 = sadd.s32 %s51, 1
      %p55 = scmp.eq.s32.totalorder %s17, 1
      %p56 = scmp.ne.s32.totalorder %s51, %s53
      %p57 = scmp.eq.s32.totalorder %s17, 0
      %p58 = por %p56, %p57
      %p59 = scmp.ne.s32.totalorder %s51, %s53
      %p60 = scmp.eq.s32.totalorder %s22, 1
      %p61 = por %p59, %p60
      %p62 = scmp.ne.s32.totalorder %s53, %s54
      %p63 = scmp.eq.s32.totalorder %s22, 0
      %p64 = por %p62, %p63
      %p65 = scmp.ne.s32.totalorder %s53, %s54
      %p66 = scmp.eq.s32.totalorder %s23, 1
      %p67 = por %p65, %p66
      %p69 = scmp.ne.s32.totalorder %s54, %s68
      %p70 = scmp.eq.s32.totalorder %s23, 0
      %p71 = por %p69, %p70
      %s73 = sadd.s32 %s72, 1
      %p76 = scmp.eq.s32.totalorder %s17, 1
      %p77 = scmp.ne.s32.totalorder %s72, %s74
      %p78 = scmp.eq.s32.totalorder %s17, 0
      %p79 = por %p77, %p78
      %p80 = scmp.ne.s32.totalorder %s72, %s74
      %p81 = scmp.eq.s32.totalorder %s22, 1
      %p82 = por %p80, %p81
      %p83 = scmp.ne.s32.totalorder %s74, %s75
      %p84 = scmp.eq.s32.totalorder %s22, 0
      %p85 = por %p83, %p84
      %p86 = scmp.ne.s32.totalorder %s74, %s75
      %p87 = scmp.eq.s32.totalorder %s23, 1
      %p88 = por %p86, %p87
      %p90 = scmp.ne.s32.totalorder %s75, %s89
      %p91 = scmp.eq.s32.totalorder %s23, 0
      %p92 = por %p90, %p91
      %s94 = sadd.s32 %s93, 1
      %p97 = scmp.eq.s32.totalorder %s17, 1
      %p98 = scmp.ne.s32.totalorder %s93, %s95
      %p99 = scmp.eq.s32.totalorder %s17, 0
      %p100 = por %p98, %p99
      %p101 = scmp.ne.s32.totalorder %s93, %s95
      %p102 = scmp.eq.s32.totalorder %s22, 1
      %p103 = por %p101, %p102
      %p104 = scmp.ne.s32.totalorder %s95, %s96
      %p105 = scmp.eq.s32.totalorder %s22, 0
      %p106 = por %p104, %p105
      %p107 = scmp.ne.s32.totalorder %s95, %s96
      %p108 = scmp.eq.s32.totalorder %s23, 1
      %p109 = por %p107, %p108
      %p111 = scmp.ne.s32.totalorder %s96, %s110
      %p112 = scmp.eq.s32.totalorder %s23, 0
      %p113 = por %p111, %p112
      %s115 = sadd.s32 %s114, 1
      %p118 = scmp.eq.s32.totalorder %s17, 1
      %p119 = scmp.ne.s32.totalorder %s114, %s116
      %p120 = scmp.eq.s32.totalorder %s17, 0
      %p121 = por %p119, %p120
      %p122 = scmp.ne.s32.totalorder %s114, %s116
      %p123 = scmp.eq.s32.totalorder %s22, 1
      %p124 = por %p122, %p123
      %p125 = scmp.ne.s32.totalorder %s116, %s117
      %p126 = scmp.eq.s32.totalorder %s22, 0
      %p127 = por %p125, %p126
      %p128 = scmp.ne.s32.totalorder %s116, %s117
      %p129 = scmp.eq.s32.totalorder %s23, 1
      %p130 = por %p128, %p129
      %p132 = scmp.ne.s32.totalorder %s117, %s131
      %p133 = scmp.eq.s32.totalorder %s23, 0
      %p134 = por %p132, %p133
      %s135 = ssub.s32 %s17, %s24
      %p136 = scmp.eq.s32.totalorder %s135, 0
      %s138 = sadd.s32 %s137, 1
      %s139 = scalar_select %p136, %s137, %s138
      %p142 = pneg %p136
      %p143 = scmp.eq.s32.totalorder %s17, 1
      %p144 = por %p142, %p143
      %p145 = scmp.ne.s32.totalorder %s137, %s140
      %p146 = scmp.eq.s32.totalorder %s17, 0
      %p147 = por %p145, %p146
      %p148 = scmp.ne.s32.totalorder %s137, %s140
      %p149 = scmp.eq.s32.totalorder %s22, 1
      %p150 = por %p148, %p149
      %p151 = scmp.ne.s32.totalorder %s140, %s141
      %p152 = scmp.eq.s32.totalorder %s22, 0
      %p153 = por %p151, %p152
      %p154 = scmp.ne.s32.totalorder %s140, %s141
      %p155 = scmp.eq.s32.totalorder %s23, 1
      %p156 = por %p154, %p155
      %p158 = scmp.ne.s32.totalorder %s141, %s157
      %p159 = scmp.eq.s32.totalorder %s23, 0
      %p160 = por %p158, %p159
      %p161 = scmp.le.s32.totalorder 1, %s17
      %p162 = scmp.lt.s32.totalorder %s17, 3
      %p163 = pnand %p161, %p162
      %p164 = pneg %p163
      // Predicated region
      $region9: #{tpu_custom_call.1} parent=5 // pred_check
        _
      $region10: #{tpu_custom_call.1} parent=5 // pred_check_branch
        %166 = sbr.rel (%p163) target = $region12
      $region11: #{tpu_custom_call.1} parent=5 // pred_region
        %s167 = ssub.s32 %s17, 1
        // Predicated region
        $region13: #{tpu_custom_call.1} parent=11 // pred_check
          %p168 = pneg %p64
        $region14: #{tpu_custom_call.1} parent=11 // pred_check_branch
          %170 = sbr.rel (%p168) target = $region16
        $region15: #{tpu_custom_call.1} parent=11 // pred_region
          _
        $region16: #{tpu_custom_call.1} parent=11 // pred_fallthru
          _
        // Predicated region
        $region17: #{tpu_custom_call.1} parent=11 // pred_check
          %p171 = pneg %p85
        $region18: #{tpu_custom_call.1} parent=11 // pred_check_branch
          %173 = sbr.rel (%p171) target = $region20
        $region19: #{tpu_custom_call.1} parent=11 // pred_region
          _
        $region20: #{tpu_custom_call.1} parent=11 // pred_fallthru
          _
        // Predicated region
        $region21: #{tpu_custom_call.1} parent=11 // pred_check
          %p174 = pneg %p106
        $region22: #{tpu_custom_call.1} parent=11 // pred_check_branch
          %176 = sbr.rel (%p174) target = $region24
        $region23: #{tpu_custom_call.1} parent=11 // pred_region
          _
        $region24: #{tpu_custom_call.1} parent=11 // pred_fallthru
          _
        // Predicated region
        $region25: #{tpu_custom_call.1} parent=11 // pred_check
          %p177 = pneg %p127
        $region26: #{tpu_custom_call.1} parent=11 // pred_check_branch
          %179 = sbr.rel (%p177) target = $region28
        $region27: #{tpu_custom_call.1} parent=11 // pred_region
          _
        $region28: #{tpu_custom_call.1} parent=11 // pred_fallthru
          _
      $region12: #{tpu_custom_call.1} parent=5 // pred_fallthru
        _
      %p180 = scmp.lt.s32.totalorder %s17, 2
      // Predicated region
      $region29: #{tpu_custom_call.1} parent=5 // pred_check
        %p181 = pneg %p180
      $region30: #{tpu_custom_call.1} parent=5 // pred_check_branch
        %183 = sbr.rel (%p181) target = $region32
      $region31: #{tpu_custom_call.1} parent=5 // pred_region
        // Predicated region
        $region33: #{tpu_custom_call.1} parent=31 // pred_check
          %p184 = pneg %p37
        $region34: #{tpu_custom_call.1} parent=31 // pred_check_branch
          %186 = sbr.rel (%p184) target = $region36
        $region35: #{tpu_custom_call.1} parent=31 // pred_region
          %s187 = sand.u32 %s27, 1
          %s188 = scalar_lea.sflag [#allocation3], %s187
          %s189 = sand.u32 %s27, 1
          %s190 = smul.addr %s189, 64
          %s191 = scalar_lea.vmem [#allocation2], %s190
          %193 = vsyncadd %s188, 0
          %s194 = smul.addr %s17, 8
          %s195 = smul.addr %s194, 8
          %s196 = scalar_lea.hbm %s0, %s195
          %s198 = sshll.u32 %s196, 4
          %s199 = int_to_ptr.hbm [resolvable:$true] %s198
          %s200 = sshll.u32 %s191, 4
          %s201 = int_to_ptr.vmem [resolvable:$true] %s200
          %203 = dma.hbm_to_vmem [thread:$0]  %s199, 1024, %s201, %s188
        $region36: #{tpu_custom_call.1} parent=31 // pred_fallthru
          _
      $region32: #{tpu_custom_call.1} parent=5 // pred_fallthru
        _
      %p204 = scmp.le.s32.totalorder 1, %s17
      %p205 = scmp.lt.s32.totalorder %s17, 3
      %p206 = pnand %p204, %p205
      %p207 = pneg %p206
      // Predicated region
      $region37: #{tpu_custom_call.1} parent=5 // pred_check
        _
      $region38: #{tpu_custom_call.1} parent=5 // pred_check_branch
        %209 = sbr.rel (%p206) target = $region40
      $region39: #{tpu_custom_call.1} parent=5 // pred_region
        %s210 = ssub.s32 %s17, 1
        %s211 = sand.u32 %s30, 1
        %s212 = scalar_lea.sflag [#allocation3], %s211
        %s213 = sand.u32 %s30, 1
        %s214 = smul.addr %s213, 64
        %s215 = scalar_lea.vmem [#allocation2], %s214
        // Predicated region
        $region41: #{tpu_custom_call.1} parent=39 // pred_check
          %p216 = pneg %p43
        $region42: #{tpu_custom_call.1} parent=39 // pred_check_branch
          %218 = sbr.rel (%p216) target = $region44
        $region43: #{tpu_custom_call.1} parent=39 // pred_region
          %220 = dma.done %s212, 1024
        $region44: #{tpu_custom_call.1} parent=39 // pred_fallthru
          _
        %s221 = sand.u32 %s30, 1
        %s222 = scalar_lea.sflag [#allocation3], %s221
        %s223 = sand.u32 %s30, 1
        %s224 = smul.addr %s223, 64
        %s225 = scalar_lea.vmem [#allocation2], %s224
        %p226 = pneg %p43
        %p227 = pneg %p40
        %p228 = pneg %p64
        %p229 = pneg %p61
        %p230 = pneg %p85
        %p231 = pneg %p82
        %p232 = pneg %p106
        %p233 = pneg %p103
        %p234 = pneg %p127
        %p235 = pneg %p124
        %p236 = pneg %p153
        %p237 = pneg %p150
        %s238 = sand.u32 %s140, 1
        %s239 = scalar_lea.sflag [#allocation4], %s238
        %s240 = sand.u32 %s140, 1
        %s241 = smul.addr %s240, 64
        %s242 = scalar_lea.vmem [#allocation5], %s241
        %v243 = vld [vmem:[%s215] sm:$0xff]
        %v244 = vld [vmem:[%s215 + $0x8] sm:$0xff]
        %v245 = vld [vmem:[%s215 + $0x10] sm:$0xff]
        %v246 = vld [vmem:[%s215 + $0x18] sm:$0xff]
        %v247 = vld [vmem:[%s215 + $0x20] sm:$0xff]
        %v248 = vld [vmem:[%s215 + $0x28] sm:$0xff]
        %v249 = vld [vmem:[%s215 + $0x30] sm:$0xff]
        %v250 = vld [vmem:[%s215 + $0x38] sm:$0xff]
        %v251 = vadd.f32 %v243, %v244
        %v252 = vadd.f32 %v251, %v245
        %v253 = vadd.f32 %v252, %v246
        %v254 = vadd.f32 %v253, %v247
        %v255 = vadd.f32 %v254, %v248
        %v256 = vadd.f32 %v255, %v249
        %v257 = vadd.f32 %v256, %v250
        %258 = vadd.xlane.f32.xlu0 %v257
        %v259 = vpop.xlane.xlu0 %258
        %v260 = vmul.f32 %v259, 0.0009765625
        %v261 = vmax.f32 %v243, %v247
        %v262 = vmax.f32 %v244, %v248
        %v263 = vmax.f32 %v245, %v249
        %v264 = vmax.f32 %v246, %v250
        %v265 = vmax.f32 %v261, %v262
        %v266 = vmax.f32 %v263, %v264
        %v267 = vmax.f32 %v265, %v266
        %268 = vmax.xlane.f32.xlu0 %v267
        %v269 = vpop.xlane.xlu0 %268
        %v271 = vlaneseq
        %v272 = vand.u32 %v271, 127
        %v273 = vperm.slane %v260, %v272
        %v276 = vperm.slane %v269, %v272
        %vm278 = vcmask 1040384
        %v279 = vsel %vm278, %v273, %v276
        %v280 = vld [vmem:[%s1] sm:$0xff]
        %v281 = vld [vmem:[%s2] sm:$0x1]
        %v283 = vperm.slane %v281, 0
        %vm285 = vcmask 64512
        %v287 = vsel %vm285, %v279, 0
        %289 = vmatpush.msra.mxu0 0.0
        %290 = vmatpush.msra.mxu0 0.0
        %291 = vmatpush.msra.mxu0 0.0
        %292 = vmatpush.msra.mxu0 0.0
        %293 = vmatpush.msra.mxu0 0.0
        %294 = vmatpush.msra.mxu0 0.0
        %295 = vmatpush.msra.mxu0 0.0
        %296 = vmatpush.msra.mxu0 0.0
        %297 = vmatpush.msra.mxu0 0.0
        %298 = vmatpush.msra.mxu0 0.0
        %299 = vmatpush.msra.mxu0 0.0
        %300 = vmatpush.msra.mxu0 0.0
        %301 = vmatpush.msra.mxu0 0.0
        %302 = vmatpush.msra.mxu0 0.0
        %303 = vmatpush.msra.mxu0 0.0
        %304 = vmatpush.msra.mxu0 %v280
        %305 = vmatmul.f32.gmra.mxu0 %v287
        %v306 = vpop.f32.mrf.mxu0
        %v307 = vadd.f32 %v283, %v306
        %308 = vdwg.mxu0
        %v309 = vmax.f32 %v307, 0.0
        %v310 = vld [vmem:[%s3] sm:$0xf]
        %v311 = vld [vmem:[%s4] sm:$0x1]
        %v313 = vperm.slane %v311, 0
        %vm315 = vcmask 31744
        %v317 = vsel %vm315, %v309, 0
        %vm319 = vcmask 1043456
        %v321 = vsel %vm319, %v310, 0
        %323 = vmatpush.msra.mxu0 0.0
        %324 = vmatpush.msra.mxu0 0.0
        %325 = vmatpush.msra.mxu0 0.0
        %326 = vmatpush.msra.mxu0 0.0
        %327 = vmatpush.msra.mxu0 0.0
        %328 = vmatpush.msra.mxu0 0.0
        %329 = vmatpush.msra.mxu0 0.0
        %330 = vmatpush.msra.mxu0 0.0
        %331 = vmatpush.msra.mxu0 0.0
        %332 = vmatpush.msra.mxu0 0.0
        %333 = vmatpush.msra.mxu0 0.0
        %334 = vmatpush.msra.mxu0 0.0
        %335 = vmatpush.msra.mxu0 0.0
        %336 = vmatpush.msra.mxu0 0.0
        %337 = vmatpush.msra.mxu0 0.0
        %338 = vmatpush.msra.mxu0 %v321
        %339 = vmatmul.f32.gmra.mxu0 %v317
        %v340 = vpop.f32.mrf.mxu0
        %v341 = vadd.f32 %v313, %v340
        %342 = vdwg.mxu0
        %v343 = vxor.u32 %v341, 2147483648
        %v344 = vmul.f32 %v343, 1.442695
        %v345 = vpow.pop %v344
        %v346 = vadd.f32 %v345, 1.0
        %v347 = vrcp.pop %v346
        %v348 = vmul.f32 %v346, %v347
        %v349 = vsub.f32 1.0, %v348
        %v350 = vmul.f32 %v347, %v349
        %v351 = vadd.f32 %v347, %v350
        %vm352 = vweird.f32 %v346
        %vm353 = vweird.f32 %v347
        %vm354 = vmor %vm352, %vm353
        %v355 = vsel %vm354, %v347, %v351
        %v356 = vand.u32 2147483647, %v346
        %vm357 = vcmp.eq.f32.partialorder %v356, 8.507059e+37
        %v358 = vand.u32 %v346, 2147483648
        %v359 = vor.u32 1.1754944e-38, %v358
        %v360 = vsel %vm357, %v359, %v355
        %v361 = vmul.f32 1.0, %v360
        %v363 = vrot.slane %v361, 1
        %v365 = vadd.f32 %v361, %v363
        %v366 = vxor.u32 %v365, 2147483648
        %v367 = vmul.f32 %v366, 1.442695
        %v368 = vpow.pop %v367
        %v369 = vadd.f32 %v368, 1.0
        %v370 = vrcp.pop %v369
        %v371 = vmul.f32 %v369, %v370
        %v372 = vsub.f32 1.0, %v371
        %v373 = vmul.f32 %v370, %v372
        %v374 = vadd.f32 %v370, %v373
        %vm375 = vweird.f32 %v369
        %vm376 = vweird.f32 %v370
        %vm377 = vmor %vm375, %vm376
        %v378 = vsel %vm377, %v370, %v374
        %v379 = vand.u32 2147483647, %v369
        %vm380 = vcmp.eq.f32.partialorder %v379, 8.507059e+37
        %v381 = vand.u32 %v369, 2147483648
        %v382 = vor.u32 1.1754944e-38, %v381
        %v383 = vsel %vm380, %v382, %v378
        %v384 = vmul.f32 1.0, %v383
        %v385 = vperm.slane %v384, 0
        %v386 = vlaneseq
        %v387 = vshrl.u32 %v386, 7
        %389 = vset.pattern.permute.xlu0 %v387
        %390 = vperm.xlu0 %389, %v385
        %v391 = vpop.permute.xlu0 %390
        %v392 = vmul.f32 %v391, %v243
        %v393 = vmul.f32 %v391, %v244
        %v394 = vmul.f32 %v391, %v245
        %v395 = vmul.f32 %v391, %v246
        %v396 = vmul.f32 %v391, %v247
        %v397 = vmul.f32 %v391, %v248
        %v398 = vmul.f32 %v391, %v249
        %v399 = vmul.f32 %v391, %v250
        %400 = vst [vmem:[%s242] sm:$0xff] %v392
        %401 = vst [vmem:[%s242 + $0x8] sm:$0xff] %v393
        %402 = vst [vmem:[%s242 + $0x10] sm:$0xff] %v394
        %403 = vst [vmem:[%s242 + $0x18] sm:$0xff] %v395
        %404 = vst [vmem:[%s242 + $0x20] sm:$0xff] %v396
        %405 = vst [vmem:[%s242 + $0x28] sm:$0xff] %v397
        %406 = vst [vmem:[%s242 + $0x30] sm:$0xff] %v398
        %407 = vst [vmem:[%s242 + $0x38] sm:$0xff] %v399
        %s408 = sand.u32 %s140, 1
        %s409 = scalar_lea.sflag [#allocation4], %s408
        %s410 = sand.u32 %s140, 1
        %s411 = smul.addr %s410, 64
        %s412 = scalar_lea.vmem [#allocation5], %s411
        // Predicated region
        $region45: #{tpu_custom_call.1} parent=39 // pred_check
          %p413 = pneg %p150
        $region46: #{tpu_custom_call.1} parent=39 // pred_check_branch
          %415 = sbr.rel (%p413) target = $region48
        $region47: #{tpu_custom_call.1} parent=39 // pred_region
          %417 = vsyncadd %s409, 0
          %s418 = smul.addr %s22, 8
          %s419 = smul.addr %s418, 8
          %s420 = scalar_lea.hbm %s5, %s419
          %s422 = sshll.u32 %s412, 4
          %s423 = int_to_ptr.vmem [resolvable:$true] %s422
          %s424 = sshll.u32 %s420, 4
          %s425 = int_to_ptr.hbm [resolvable:$true] %s424
          %427 = dma.vmem_to_hbm [thread:$0]  %s423, 1024, %s425, %s409
        $region48: #{tpu_custom_call.1} parent=39 // pred_fallthru
          _
      $region40: #{tpu_custom_call.1} parent=5 // pred_fallthru
        _
      %p428 = scmp.le.s32.totalorder 2, %s17
      // Predicated region
      $region49: #{tpu_custom_call.1} parent=5 // pred_check
        %p429 = pneg %p428
      $region50: #{tpu_custom_call.1} parent=5 // pred_check_branch
        %431 = sbr.rel (%p429) target = $region52
      $region51: #{tpu_custom_call.1} parent=5 // pred_region
        %s432 = ssub.s32 %s17, 2
        // Predicated region
        $region53: #{tpu_custom_call.1} parent=51 // pred_check
          %p433 = pneg %p156
        $region54: #{tpu_custom_call.1} parent=51 // pred_check_branch
          %435 = sbr.rel (%p433) target = $region56
        $region55: #{tpu_custom_call.1} parent=51 // pred_region
          %s436 = sand.u32 %s141, 1
          %s437 = scalar_lea.sflag [#allocation4], %s436
          %s438 = sand.u32 %s141, 1
          %s439 = smul.addr %s438, 64
          %s440 = scalar_lea.vmem [#allocation5], %s439
          %442 = dma.done %s437, 1024
        $region56: #{tpu_custom_call.1} parent=51 // pred_fallthru
          _
      $region52: #{tpu_custom_call.1} parent=5 // pred_fallthru
        _
    $region6: #{tpu_custom_call.1} parent=1 // loop_footer
      %s21 = sadd.s32 1, %s17
    $region7: #{tpu_custom_call.1} parent=1 // loop_footer_branch
      %16 = sbr.rel target = $region3
    $region8: #{tpu_custom_call.1} parent=1 // loop_exit
      _
    %443 = vsyncpa [#allocation3], 1
    %s444 = scalar_lea.sflag [#allocation3], 1
    %445 = vsyncpa %s444, 1
    %446 = vsyncpa [#allocation4], 1
    %s447 = scalar_lea.sflag [#allocation4], 1
    %448 = vsyncpa %s447, 1

</llo_original>
